<compile_context>
chip_gen: v6e
topology: v6e:2x2x1
jax: 0.10.0
libtpu: 0.0.40
codegen_flags: <defaults>
</compile_context>

<pallas_src>
import jax
import jax.numpy as jnp
from jax.experimental import pallas as pl
from jax.experimental.pallas import tpu as pltpu

IN_FEATURES = 100   # fc1 fan-in (kept unpadded; contracting dim only)
H1_PAD = 128        # fc1 fan-out 50  -> padded to lane width
H2_PAD = 128        # fc2 fan-out 25  -> padded to lane width
OUT_PAD = 8         # fc3 fan-out 2   -> padded to a tiny lane-masked width
OUT_FEATURES = 2


def mlp_kernel(x_ref, w1_ref, b1_ref, w2_ref, b2_ref, w3_ref, b3_ref, o_ref):
    # x_ref: (TB, 100) f32;  W1: (100,128) bf16;  W2: (128,128) bf16;
    # W3: (128, 8) bf16;  biases f32;  o_ref: (TB, 8) f32.
    # bf16 cast happens here (VPU), not in the wrapper, so x is read from
    # HBM exactly once.
    x = x_ref[...].astype(jnp.bfloat16)

    # Layer 1: ReLU(x @ W1 + b1) — f32 MXU accumulation, f32 epilogue.
    h1 = jnp.dot(x, w1_ref[...], preferred_element_type=jnp.float32)
    h1 = jnp.maximum(h1 + b1_ref[...], 0.0)

    # Layer 2: ReLU(h1 @ W2 + b2).
    h2 = jnp.dot(h1.astype(jnp.bfloat16), w2_ref[...],
                 preferred_element_type=jnp.float32)
    h2 = jnp.maximum(h2 + b2_ref[...], 0.0)

    # Layer 3: h2 @ W3 + b3 (no activation). Narrow (8-wide) store; the
    # wrapper slices the 2 real output features back out.
    out = jnp.dot(h2.astype(jnp.bfloat16), w3_ref[...],
                  preferred_element_type=jnp.float32)
    o_ref[...] = (out + b3_ref[...]).astype(o_ref.dtype)


def _round_up(n, m):
    return ((n + m - 1) // m) * m


def _pad2(a, rows, cols):
    return jnp.pad(a, ((0, rows - a.shape[0]), (0, cols - a.shape[1])))


def prepare_params(w1, b1, w2, b2, w3, b3):
    """One-time weight/bias padding + bf16 cast (hoisted out of the forward).

    Zero-padding is numerically exact: padded h1/h2 columns are ReLU(0)=0,
    and padded output columns are sliced away by the wrapper.
    """
    return (
        _pad2(w1, IN_FEATURES, H1_PAD).astype(jnp.bfloat16),
        _pad2(b1, 1, H1_PAD).astype(jnp.float32),
        _pad2(w2, H1_PAD, H2_PAD).astype(jnp.bfloat16),
        _pad2(b2, 1, H2_PAD).astype(jnp.float32),
        _pad2(w3, H2_PAD, OUT_PAD).astype(jnp.bfloat16),
        _pad2(b3, 1, OUT_PAD).astype(jnp.float32),
    )


def _choose_tiling(batch, block_rows):
    """Pick (tile_rows, padded_batch): tile is a multiple of 8, padding waste
    is bounded by ~8 rows per grid step, and large batches get >= 2 grid
    steps so the 'parallel' axis can shard across v7x's two TensorCores."""
    block_rows = max(8, _round_up(block_rows, 8))
    rb8 = _round_up(batch, 8)
    n_steps = max(1, pl.cdiv(rb8, block_rows))
    if n_steps == 1 and rb8 > block_rows // 2:
        n_steps = 2  # give the second TensorCore (v7x) work on large-ish batches
    tb = _round_up(pl.cdiv(rb8, n_steps), 8)
    return tb, n_steps * tb


def mlp_forward(x, prepared_params, *, block_rows=2048):
    """x: (batch, 100) f32.  prepared_params: output of prepare_params()."""
    batch, in_features = x.shape
    assert in_features == IN_FEATURES

    tb, padded_batch = _choose_tiling(batch, block_rows)
    if padded_batch != batch:
        # Only the batch rows are padded (never the 100-wide feature axis).
        x = jnp.pad(x, ((0, padded_batch - batch), (0, 0)))
    n_steps = padded_batch // tb

    w1p, b1p, w2p, b2p, w3p, b3p = prepared_params

    def resident(shape):
        # Constant index map -> block stays VMEM-resident across grid steps.
        return pl.BlockSpec(shape, lambda i: (0,) * len(shape))

    # Advisory cost estimate with the REAL (unpadded) flops / bytes.
    flops = 2 * batch * (100 * 50 + 50 * 25 + 25 * 2)
    bytes_accessed = (
        batch * IN_FEATURES * 4          # x read (f32)
        + batch * OUT_FEATURES * 4       # useful output written (f32)
        + sum(int(p.size) * p.dtype.itemsize for p in prepared_params)
    )

    out_padded = pl.pallas_call(
        mlp_kernel,
        out_shape=jax.ShapeDtypeStruct((padded_batch, OUT_PAD), jnp.float32),
        grid=(n_steps,),
        in_specs=[
            pl.BlockSpec((tb, IN_FEATURES), lambda i: (i, 0)),   # x: batch-tiled
            resident((IN_FEATURES, H1_PAD)), resident((1, H1_PAD)),  # W1, b1
            resident((H1_PAD, H2_PAD)),      resident((1, H2_PAD)),  # W2, b2
            resident((H2_PAD, OUT_PAD)),     resident((1, OUT_PAD)),  # W3, b3
        ],
        out_specs=pl.BlockSpec((tb, OUT_PAD), lambda i: (i, 0)),
        compiler_params=pltpu.CompilerParams(
            dimension_semantics=("parallel",)),  # batch sharded across TCs (v7x)
        cost_estimate=pl.CostEstimate(
            flops=flops, transcendentals=0, bytes_accessed=bytes_accessed),
    )(x, w1p, b1p, w2p, b2p, w3p, b3p)

    return out_padded[:batch, :OUT_FEATURES]


def init_params(key):
    # Deterministic init mimicking nn.Linear's U(-1/sqrt(fan_in), 1/sqrt(fan_in)).
    dims = [(100, 50), (50, 25), (25, 2)]
    params = []
    for fan_in, fan_out in dims:
        kw, kb, key = jax.random.split(key, 3)
        bound = 1.0 / jnp.sqrt(fan_in)
        w = jax.random.uniform(kw, (fan_in, fan_out), jnp.float32, -bound, bound)
        b = jax.random.uniform(kb, (1, fan_out), jnp.float32, -bound, bound)
        params.extend([w, b])
    return params


def reference_forward_bf16(x, w1, b1, w2, b2, w3, b3):
    # Same quantization scheme as the kernel (bf16 dot operands, f32 accum).
    xb = x.astype(jnp.bfloat16)
    h1 = jnp.maximum(
        jnp.dot(xb, w1.astype(jnp.bfloat16),
                preferred_element_type=jnp.float32) + b1, 0.0)
    h2 = jnp.maximum(
        jnp.dot(h1.astype(jnp.bfloat16), w2.astype(jnp.bfloat16),
                preferred_element_type=jnp.float32) + b2, 0.0)
    return jnp.dot(h2.astype(jnp.bfloat16), w3.astype(jnp.bfloat16),
                   preferred_element_type=jnp.float32) + b3


def reference_forward_f32(x, w1, b1, w2, b2, w3, b3):
    h1 = jnp.maximum(x @ w1 + b1, 0.0)
    h2 = jnp.maximum(h1 @ w2 + b2, 0.0)
    return h2 @ w3 + b3


if __name__ == "__main__":
    key = jax.random.PRNGKey(0)
    kx, kp = jax.random.split(key)

    w1, b1, w2, b2, w3, b3 = init_params(kp)
    params = prepare_params(w1, b1, w2, b2, w3, b3)

    # Small deterministic example consistent with the module (100-feature MLP).
    batch = 8
    x = jax.random.normal(kx, (batch, IN_FEATURES), dtype=jnp.float32)

    out = jax.block_until_ready(mlp_forward(x, params))
    assert out.shape == (batch, OUT_FEATURES)

    # Tight check against a reference using the same bf16-operand / f32-accum
    # quantization, loose check against the pure-f32 PyTorch-equivalent math.
    ref_bf16 = reference_forward_bf16(x, w1, b1, w2, b2, w3, b3)
    assert jnp.allclose(out, ref_bf16, atol=1e-4, rtol=1e-4)
    ref_f32 = reference_forward_f32(x, w1, b1, w2, b2, w3, b3)
    assert jnp.allclose(out, ref_f32, atol=5e-2, rtol=5e-2)

    # Exercise the multi-step grid + ragged-batch padding path as well.
    batch2 = 300
    x2 = jax.random.normal(kx, (batch2, IN_FEATURES), dtype=jnp.float32)
    out2 = jax.block_until_ready(mlp_forward(x2, params, block_rows=128))
    assert out2.shape == (batch2, OUT_FEATURES)
    ref2 = reference_forward_bf16(x2, w1, b1, w2, b2, w3, b3)
    assert jnp.allclose(out2, ref2, atol=1e-4, rtol=1e-4)

    print("KERNEL_OK")
</pallas_src>

<mosaic_0001>
module attributes {stable_mosaic.version = 11 : i64} {
  func.func @mlp_kernel(%arg0: i32, %arg1: memref<8x100xf32, #tpu.memory_space<vmem>>, %arg2: memref<100x128xbf16, #tpu.memory_space<vmem>>, %arg3: memref<1x128xf32, #tpu.memory_space<vmem>>, %arg4: memref<128x128xbf16, #tpu.memory_space<vmem>>, %arg5: memref<1x128xf32, #tpu.memory_space<vmem>>, %arg6: memref<128x8xbf16, #tpu.memory_space<vmem>>, %arg7: memref<1x8xf32, #tpu.memory_space<vmem>>, %arg8: memref<8x8xf32, #tpu.memory_space<vmem>>) attributes {dimension_semantics = [#tpu.dimension_semantics<parallel>], iteration_bounds = array<i64: 1>, scalar_prefetch = 0 : i64, scratch_operands = 0 : i64, tpu.core_type = #tpu.core_type<tc>, window_params = [{transform_indices = @transform_0, window_bounds = array<i64: 8, 100>}, {pipeline_mode = #tpu.pipeline_mode<synchronous>, transform_indices = @transform_1, window_bounds = array<i64: 100, 128>}, {pipeline_mode = #tpu.pipeline_mode<synchronous>, transform_indices = @transform_2, window_bounds = array<i64: 1, 128>}, {pipeline_mode = #tpu.pipeline_mode<synchronous>, transform_indices = @transform_3, window_bounds = array<i64: 128, 128>}, {pipeline_mode = #tpu.pipeline_mode<synchronous>, transform_indices = @transform_4, window_bounds = array<i64: 1, 128>}, {pipeline_mode = #tpu.pipeline_mode<synchronous>, transform_indices = @transform_5, window_bounds = array<i64: 128, 8>}, {pipeline_mode = #tpu.pipeline_mode<synchronous>, transform_indices = @transform_6, window_bounds = array<i64: 1, 8>}, {transform_indices = @transform_7, window_bounds = array<i64: 8, 8>}]} {
    %c0 = arith.constant 0 : index
    %c0_0 = arith.constant 0 : index
    %0 = vector.load %arg1[%c0, %c0_0] : memref<8x100xf32, #tpu.memory_space<vmem>>, vector<8x100xf32>
    %1 = arith.truncf %0 : vector<8x100xf32> to vector<8x100xbf16>
    %c0_1 = arith.constant 0 : index
    %c0_2 = arith.constant 0 : index
    %2 = vector.load %arg2[%c0_1, %c0_2] : memref<100x128xbf16, #tpu.memory_space<vmem>>, vector<100x128xbf16>
    %cst = arith.constant dense<0.000000e+00> : vector<8x128xf32>
    %3 = tpu.matmul %1, %2, %cst {dimension_numbers = #tpu.dot_dimension_numbers<[1], [0], [0], [1], [0, 0, 1, 1], [], []>} : vector<8x100xbf16>, vector<100x128xbf16>, vector<8x128xf32> -> vector<8x128xf32>
    %c0_3 = arith.constant 0 : index
    %c0_4 = arith.constant 0 : index
    %4 = vector.load %arg3[%c0_3, %c0_4] : memref<1x128xf32, #tpu.memory_space<vmem>>, vector<1x128xf32>
    %5 = vector.broadcast %4 : vector<1x128xf32> to vector<8x128xf32>
    %6 = arith.addf %3, %5 : vector<8x128xf32>
    %cst_5 = arith.constant 0.000000e+00 : f32
    %7 = vector.broadcast %cst_5 : f32 to vector<8x128xf32>
    %8 = arith.maximumf %6, %7 : vector<8x128xf32>
    %9 = arith.truncf %8 : vector<8x128xf32> to vector<8x128xbf16>
    %c0_6 = arith.constant 0 : index
    %c0_7 = arith.constant 0 : index
    %10 = vector.load %arg4[%c0_6, %c0_7] : memref<128x128xbf16, #tpu.memory_space<vmem>>, vector<128x128xbf16>
    %cst_8 = arith.constant dense<0.000000e+00> : vector<8x128xf32>
    %11 = tpu.matmul %9, %10, %cst_8 {dimension_numbers = #tpu.dot_dimension_numbers<[1], [0], [0], [1], [0, 0, 1, 1], [], []>} : vector<8x128xbf16>, vector<128x128xbf16>, vector<8x128xf32> -> vector<8x128xf32>
    %c0_9 = arith.constant 0 : index
    %c0_10 = arith.constant 0 : index
    %12 = vector.load %arg5[%c0_9, %c0_10] : memref<1x128xf32, #tpu.memory_space<vmem>>, vector<1x128xf32>
    %13 = vector.broadcast %12 : vector<1x128xf32> to vector<8x128xf32>
    %14 = arith.addf %11, %13 : vector<8x128xf32>
    %cst_11 = arith.constant 0.000000e+00 : f32
    %15 = vector.broadcast %cst_11 : f32 to vector<8x128xf32>
    %16 = arith.maximumf %14, %15 : vector<8x128xf32>
    %17 = arith.truncf %16 : vector<8x128xf32> to vector<8x128xbf16>
    %c0_12 = arith.constant 0 : index
    %c0_13 = arith.constant 0 : index
    %18 = vector.load %arg6[%c0_12, %c0_13] : memref<128x8xbf16, #tpu.memory_space<vmem>>, vector<128x8xbf16>
    %cst_14 = arith.constant dense<0.000000e+00> : vector<8x8xf32>
    %19 = tpu.matmul %17, %18, %cst_14 {dimension_numbers = #tpu.dot_dimension_numbers<[1], [0], [0], [1], [0, 0, 1, 1], [], []>} : vector<8x128xbf16>, vector<128x8xbf16>, vector<8x8xf32> -> vector<8x8xf32>
    %c0_15 = arith.constant 0 : index
    %c0_16 = arith.constant 0 : index
    %20 = vector.load %arg7[%c0_15, %c0_16] : memref<1x8xf32, #tpu.memory_space<vmem>>, vector<1x8xf32>
    %21 = vector.broadcast %20 : vector<1x8xf32> to vector<8x8xf32>
    %22 = arith.addf %19, %21 : vector<8x8xf32>
    %c0_17 = arith.constant 0 : index
    %c0_18 = arith.constant 0 : index
    %23 = vector.load %arg8[%c0_17, %c0_18] : memref<8x8xf32, #tpu.memory_space<vmem>>, vector<8x8xf32>
    tpu.vector_store %arg8[%c0_17, %c0_18], %22 {strides = array<i32>} : memref<8x8xf32, #tpu.memory_space<vmem>>, vector<8x8xf32>,
    return
  }
  func.func @transform_0(%arg0: i32) -> (i32, i32) {
    %c0_i32 = arith.constant 0 : i32
    %c0_i32_0 = arith.constant 0 : i32
    return %arg0, %c0_i32 : i32, i32
  }
  func.func @transform_1(%arg0: i32) -> (i32, i32) {
    %c0_i32 = arith.constant 0 : i32
    %c0_i32_0 = arith.constant 0 : i32
    %c0_i32_1 = arith.constant 0 : i32
    return %c0_i32, %c0_i32_0 : i32, i32
  }
  func.func @transform_2(%arg0: i32) -> (i32, i32) {
    %c0_i32 = arith.constant 0 : i32
    %c0_i32_0 = arith.constant 0 : i32
    %c0_i32_1 = arith.constant 0 : i32
    return %c0_i32, %c0_i32_0 : i32, i32
  }
  func.func @transform_3(%arg0: i32) -> (i32, i32) {
    %c0_i32 = arith.constant 0 : i32
    %c0_i32_0 = arith.constant 0 : i32
    %c0_i32_1 = arith.constant 0 : i32
    return %c0_i32, %c0_i32_0 : i32, i32
  }
  func.func @transform_4(%arg0: i32) -> (i32, i32) {
    %c0_i32 = arith.constant 0 : i32
    %c0_i32_0 = arith.constant 0 : i32
    %c0_i32_1 = arith.constant 0 : i32
    return %c0_i32, %c0_i32_0 : i32, i32
  }
  func.func @transform_5(%arg0: i32) -> (i32, i32) {
    %c0_i32 = arith.constant 0 : i32
    %c0_i32_0 = arith.constant 0 : i32
    %c0_i32_1 = arith.constant 0 : i32
    return %c0_i32, %c0_i32_0 : i32, i32
  }
  func.func @transform_6(%arg0: i32) -> (i32, i32) {
    %c0_i32 = arith.constant 0 : i32
    %c0_i32_0 = arith.constant 0 : i32
    %c0_i32_1 = arith.constant 0 : i32
    return %c0_i32, %c0_i32_0 : i32, i32
  }
  func.func @transform_7(%arg0: i32) -> (i32, i32) {
    %c0_i32 = arith.constant 0 : i32
    %c0_i32_0 = arith.constant 0 : i32
    return %arg0, %c0_i32 : i32, i32
  }
}

</mosaic_0001>

<llo_original>
// kernel: tpu_custom_call.1
$region0: #{tpu_custom_call.1}
  #allocation0 [shape = 'u32[]', space=smem, size = 0x4, offset = 0x4, fixed_abs, tag = 'smem constant byte address 0x4 - core index']
  #allocation1 [shape = 'u32[144,128]{1,0:T(1,128)}', space=vmem, size = 0x12000, scoped, tag = 'internal scratch']
  %s0 = inlined_call_operand.vmem [shape: f32[8,100], index: 0, kind: input, shape index: {}]
  %s1 = inlined_call_operand.hbm [shape: bf16[100,128], index: 1, kind: input, shape index: {}]
  %s2 = inlined_call_operand.vmem [shape: f32[1,128], index: 2, kind: input, shape index: {}]
  %s3 = inlined_call_operand.vmem [shape: bf16[128,128], index: 3, kind: input, shape index: {}]
  %s4 = inlined_call_operand.hbm [shape: f32[1,128], index: 4, kind: input, shape index: {}]
  %s5 = inlined_call_operand.vmem [shape: bf16[128,8], index: 5, kind: input, shape index: {}]
  %s6 = inlined_call_operand.vmem [shape: f32[1,8], index: 6, kind: input, shape index: {}]
  %s7 = inlined_call_operand.hbm [shape: f32[8,8], index: 7, kind: output, shape index: {}]
  %s8 = sld [smem:[#allocation0]]
  $region46: #{tpu_custom_call.1} parent=0
    _
  %s10 = ssub.s32 1, %s8
  %s11 = scalar_select 0, %s10, %s8
  $region1: #{tpu_custom_call.1} parent=0
    #allocation2 [shape = 'u8[26624]{0}', space=vmem, size = 0x6800, scoped, tag = 'input window, operand 1, single buffered']
    #allocation3 [shape = 's32[1]{0}', space=sflag, size = 0x4, scoped, tag = 'scoped memory for tpu_custom_call.1']
    #allocation4 [shape = 's32[1]{0}', space=sflag, size = 0x4, scoped, tag = 'scoped memory for tpu_custom_call.1']
    #allocation5 [shape = 'u8[512]{0}', space=vmem, size = 0x400, scoped, tag = 'input window, operand 4, single buffered']
    #allocation6 [shape = 's32[1]{0}', space=sflag, size = 0x4, scoped, tag = 'scoped memory for tpu_custom_call.1']
    #allocation7 [shape = 'u8[4096]{0}', space=vmem, size = 0x1000, scoped, tag = 'output window, operand 0, single buffered']
    %12 = vsyncpa [#allocation3], 0
    %13 = vsyncpa [#allocation6], 0
    %14 = vsyncpa [#allocation4], 0
    // Predicated region
    $region2: #{tpu_custom_call.1} parent=1 // pred_check
      _
    $region3: #{tpu_custom_call.1} parent=1 // pred_check_branch
      %16 = sbr.rel (0) target = $region5
    $region4: #{tpu_custom_call.1} parent=1 // pred_region
      _
    $region5: #{tpu_custom_call.1} parent=1 // pred_fallthru
      _
    // Predicated region
    $region6: #{tpu_custom_call.1} parent=1 // pred_check
      _
    $region7: #{tpu_custom_call.1} parent=1 // pred_check_branch
      %18 = sbr.rel (0) target = $region9
    $region8: #{tpu_custom_call.1} parent=1 // pred_region
      %s20 = ssub.s32 832, 832
      %21 = vsyncadd [#allocation3], %s20
      %s22 = sshll.u32 [#allocation2], 4
      %s23 = int_to_ptr.vmem [resolvable:$true] %s22
      %28 = dma.hbm_to_vmem [thread:$0]  %s1, 832, %s23, [#allocation3], 64, 64, 4
    $region9: #{tpu_custom_call.1} parent=1 // pred_fallthru
      _
    // Predicated region
    $region10: #{tpu_custom_call.1} parent=1 // pred_check
      _
    $region11: #{tpu_custom_call.1} parent=1 // pred_check_branch
      %30 = sbr.rel (0) target = $region13
    $region12: #{tpu_custom_call.1} parent=1 // pred_region
      _
    $region13: #{tpu_custom_call.1} parent=1 // pred_fallthru
      _
    // Predicated region
    $region14: #{tpu_custom_call.1} parent=1 // pred_check
      _
    $region15: #{tpu_custom_call.1} parent=1 // pred_check_branch
      %32 = sbr.rel (0) target = $region17
    $region16: #{tpu_custom_call.1} parent=1 // pred_region
      _
    $region17: #{tpu_custom_call.1} parent=1 // pred_fallthru
      _
    // Predicated region
    $region18: #{tpu_custom_call.1} parent=1 // pred_check
      _
    $region19: #{tpu_custom_call.1} parent=1 // pred_check_branch
      %34 = sbr.rel (0) target = $region21
    $region20: #{tpu_custom_call.1} parent=1 // pred_region
      %s36 = ssub.s32 16, 16
      %37 = vsyncadd [#allocation6], %s36
      %s39 = sshll.u32 [#allocation5], 4
      %s40 = int_to_ptr.vmem [resolvable:$true] %s39
      %42 = dma.hbm_to_vmem [thread:$0]  %s4, 16, %s40, [#allocation6]
    $region21: #{tpu_custom_call.1} parent=1 // pred_fallthru
      _
    // Predicated region
    $region22: #{tpu_custom_call.1} parent=1 // pred_check
      _
    $region23: #{tpu_custom_call.1} parent=1 // pred_check_branch
      %44 = sbr.rel (0) target = $region25
    $region24: #{tpu_custom_call.1} parent=1 // pred_region
      _
    $region25: #{tpu_custom_call.1} parent=1 // pred_fallthru
      _
    // Predicated region
    $region26: #{tpu_custom_call.1} parent=1 // pred_check
      _
    $region27: #{tpu_custom_call.1} parent=1 // pred_check_branch
      %46 = sbr.rel (0) target = $region29
    $region28: #{tpu_custom_call.1} parent=1 // pred_region
      _
    $region29: #{tpu_custom_call.1} parent=1 // pred_fallthru
      _
    // Predicated region
    $region30: #{tpu_custom_call.1} parent=1 // pred_check
      _
    $region31: #{tpu_custom_call.1} parent=1 // pred_check_branch
      %48 = sbr.rel (0) target = $region33
    $region32: #{tpu_custom_call.1} parent=1 // pred_region
      %49 = dma.done [#allocation3], 832
    $region33: #{tpu_custom_call.1} parent=1 // pred_fallthru
      _
    // Predicated region
    $region34: #{tpu_custom_call.1} parent=1 // pred_check
      _
    $region35: #{tpu_custom_call.1} parent=1 // pred_check_branch
      %51 = sbr.rel (0) target = $region37
    $region36: #{tpu_custom_call.1} parent=1 // pred_region
      %52 = dma.done [#allocation6], 16
    $region37: #{tpu_custom_call.1} parent=1 // pred_fallthru
      _
    %v54 = vld [vmem:[%s0] sm:$0xff]
    %v55 = vpack.c.bf16 %v54, %v54
    %v56 = vld [vmem:[#allocation2] sm:$0xf]
    %v57 = vld [vmem:[#allocation2 + $0x4] sm:$0xf]
    %v58 = vld [vmem:[#allocation2 + $0x8] sm:$0xf]
    %v59 = vld [vmem:[#allocation2 + $0xc] sm:$0xf]
    %v60 = vld [vmem:[#allocation2 + $0x10] sm:$0xf]
    %v61 = vld [vmem:[#allocation2 + $0x14] sm:$0xf]
    %v62 = vld [vmem:[#allocation2 + $0x18] sm:$0xf]
    %v63 = vld [vmem:[#allocation2 + $0x1c] sm:$0xf]
    %v64 = vld [vmem:[#allocation2 + $0x20] sm:$0xf]
    %v65 = vld [vmem:[#allocation2 + $0x24] sm:$0xf]
    %v66 = vld [vmem:[#allocation2 + $0x28] sm:$0xf]
    %v67 = vld [vmem:[#allocation2 + $0x2c] sm:$0xf]
    %v68 = vld [vmem:[#allocation2 + $0x30] sm:$0x3]
    %v69 = vld [vmem:[%s2] sm:$0x1]
    %v71 = vlaneseq
    %v72 = vshrl.u32 %v71, 7
    %v73 = vsub.s32 0, %v72
    %v74 = vrot.slane %v69, %v73
    %v89 = vunpack.c.l.b16 %v56
    %v90 = vunpack.c.l.b16 %v57
    %v91 = vunpack.c.l.b16 %v58
    %v92 = vunpack.c.l.b16 %v59
    %v93 = vunpack.c.l.b16 %v60
    %v94 = vunpack.c.l.b16 %v61
    %v95 = vunpack.c.l.b16 %v62
    %v96 = vunpack.c.l.b16 %v63
    %v97 = vunpack.c.l.b16 %v64
    %v98 = vunpack.c.l.b16 %v65
    %v99 = vunpack.c.l.b16 %v66
    %v100 = vunpack.c.l.b16 %v67
    %v101 = vunpack.c.l.b16 %v68
    %v102 = vpack.c.b16 %v90, %v89
    %v103 = vpack.c.b16 %v92, %v91
    %v104 = vpack.c.b16 %v94, %v93
    %v105 = vpack.c.b16 %v96, %v95
    %v106 = vpack.c.b16 %v98, %v97
    %v107 = vpack.c.b16 %v100, %v99
    %v108 = vpack.c.b16 %v101, %v101
    %vm115 = vcmask 818176
    %v117 = vsel %vm115, %v55, 0
    %vm119 = vcmask 1041408
    %v121 = vsel %vm119, %v108, 0
    %123 = vmatprep.subr.bf16.mxu0 0
    %124 = vmatpush1.bf16.msra.mxu0 0
    %125 = vmatprep.subr.bf16.mxu0 0
    %126 = vmatpush1.bf16.msra.mxu0 %v121
    %127 = vmatprep.subr.bf16.mxu0 0
    %128 = vmatpush1.bf16.msra.mxu0 %v107
    %129 = vmatprep.subr.bf16.mxu0 0
    %130 = vmatpush1.bf16.msra.mxu0 %v106
    %131 = vmatprep.subr.bf16.mxu0 0
    %132 = vmatpush1.bf16.msra.mxu0 %v105
    %133 = vmatprep.subr.bf16.mxu0 0
    %134 = vmatpush1.bf16.msra.mxu0 %v104
    %135 = vmatprep.subr.bf16.mxu0 0
    %136 = vmatpush1.bf16.msra.mxu0 %v103
    %137 = vmatprep.subr.bf16.mxu0 0
    %138 = vmatpush1.bf16.msra.mxu0 %v102
    %139 = vmatprep.subr.bf16.mxu0 0
    %140 = vmatpush2.bf16.msra.mxu0 0
    %141 = vmatprep.subr.bf16.mxu0 0
    %142 = vmatpush2.bf16.msra.mxu0 0
    %143 = vmatprep.subr.bf16.mxu0 0
    %144 = vmatpush2.bf16.msra.mxu0 0
    %145 = vmatprep.subr.bf16.mxu0 0
    %146 = vmatpush2.bf16.msra.mxu0 0
    %147 = vmatprep.subr.bf16.mxu0 0
    %148 = vmatpush2.bf16.msra.mxu0 0
    %149 = vmatprep.subr.bf16.mxu0 0
    %150 = vmatpush2.bf16.msra.mxu0 0
    %151 = vmatprep.subr.bf16.mxu0 0
    %152 = vmatpush2.bf16.msra.mxu0 0
    %153 = vmatprep.subr.bf16.mxu0 0
    %154 = vmatpush2.bf16.msra.mxu0 0
    %155 = vmatprep.mubr.bf16.mxu0 0
    %156 = vmatmul.mubr.bf16.gmra.mxu0 %v117
    %v157 = vpop.f32.mrf.mxu0
    %v158 = vadd.f32 %v74, %v157
    %v159 = vpop.f32.mrf.mxu0
    %v160 = vpop.f32.mrf.mxu0
    %v161 = vpop.f32.mrf.mxu0
    %162 = vdwg.mxu0
    %v163 = vmax.f32 %v158, 0.0
    %v164 = vpack.c.bf16 %v163, %v163
    %v165 = vld [vmem:[%s3] sm:$0xf]
    %v166 = vld [vmem:[%s3 + $0x4] sm:$0xf]
    %v167 = vld [vmem:[%s3 + $0x8] sm:$0xf]
    %v168 = vld [vmem:[%s3 + $0xc] sm:$0xf]
    %v169 = vld [vmem:[%s3 + $0x10] sm:$0xf]
    %v170 = vld [vmem:[%s3 + $0x14] sm:$0xf]
    %v171 = vld [vmem:[%s3 + $0x18] sm:$0xf]
    %v172 = vld [vmem:[%s3 + $0x1c] sm:$0xf]
    %v173 = vld [vmem:[%s3 + $0x20] sm:$0xf]
    %v174 = vld [vmem:[%s3 + $0x24] sm:$0xf]
    %v175 = vld [vmem:[%s3 + $0x28] sm:$0xf]
    %v176 = vld [vmem:[%s3 + $0x2c] sm:$0xf]
    %v177 = vld [vmem:[%s3 + $0x30] sm:$0xf]
    %v178 = vld [vmem:[%s3 + $0x34] sm:$0xf]
    %v179 = vld [vmem:[%s3 + $0x38] sm:$0xf]
    %v180 = vld [vmem:[%s3 + $0x3c] sm:$0xf]
    %v181 = vld [vmem:[#allocation5] sm:$0x1]
    %v183 = vlaneseq
    %v184 = vshrl.u32 %v183, 7
    %v185 = vsub.s32 0, %v184
    %v186 = vrot.slane %v181, %v185
    %v204 = vunpack.c.l.b16 %v165
    %v205 = vunpack.c.l.b16 %v166
    %v206 = vunpack.c.l.b16 %v167
    %v207 = vunpack.c.l.b16 %v168
    %v208 = vunpack.c.l.b16 %v169
    %v209 = vunpack.c.l.b16 %v170
    %v210 = vunpack.c.l.b16 %v171
    %v211 = vunpack.c.l.b16 %v172
    %v212 = vunpack.c.l.b16 %v173
    %v213 = vunpack.c.l.b16 %v174
    %v214 = vunpack.c.l.b16 %v175
    %v215 = vunpack.c.l.b16 %v176
    %v216 = vunpack.c.l.b16 %v177
    %v217 = vunpack.c.l.b16 %v178
    %v218 = vunpack.c.l.b16 %v179
    %v219 = vunpack.c.l.b16 %v180
    %v220 = vpack.c.b16 %v205, %v204
    %v221 = vpack.c.b16 %v207, %v206
    %v222 = vpack.c.b16 %v209, %v208
    %v223 = vpack.c.b16 %v211, %v210
    %v224 = vpack.c.b16 %v213, %v212
    %v225 = vpack.c.b16 %v215, %v214
    %v226 = vpack.c.b16 %v217, %v216
    %v227 = vpack.c.b16 %v219, %v218
    %236 = vmatprep.subr.bf16.mxu0 0
    %237 = vmatpush1.bf16.msra.mxu0 %v227
    %238 = vmatprep.subr.bf16.mxu0 0
    %239 = vmatpush1.bf16.msra.mxu0 %v226
    %240 = vmatprep.subr.bf16.mxu0 0
    %241 = vmatpush1.bf16.msra.mxu0 %v225
    %242 = vmatprep.subr.bf16.mxu0 0
    %243 = vmatpush1.bf16.msra.mxu0 %v224
    %244 = vmatprep.subr.bf16.mxu0 0
    %245 = vmatpush1.bf16.msra.mxu0 %v223
    %246 = vmatprep.subr.bf16.mxu0 0
    %247 = vmatpush1.bf16.msra.mxu0 %v222
    %248 = vmatprep.subr.bf16.mxu0 0
    %249 = vmatpush1.bf16.msra.mxu0 %v221
    %250 = vmatprep.subr.bf16.mxu0 0
    %251 = vmatpush1.bf16.msra.mxu0 %v220
    %252 = vmatprep.subr.bf16.mxu0 0
    %253 = vmatpush2.bf16.msra.mxu0 0
    %254 = vmatprep.subr.bf16.mxu0 0
    %255 = vmatpush2.bf16.msra.mxu0 0
    %256 = vmatprep.subr.bf16.mxu0 0
    %257 = vmatpush2.bf16.msra.mxu0 0
    %258 = vmatprep.subr.bf16.mxu0 0
    %259 = vmatpush2.bf16.msra.mxu0 0
    %260 = vmatprep.subr.bf16.mxu0 0
    %261 = vmatpush2.bf16.msra.mxu0 0
    %262 = vmatprep.subr.bf16.mxu0 0
    %263 = vmatpush2.bf16.msra.mxu0 0
    %264 = vmatprep.subr.bf16.mxu0 0
    %265 = vmatpush2.bf16.msra.mxu0 0
    %266 = vmatprep.subr.bf16.mxu0 0
    %267 = vmatpush2.bf16.msra.mxu0 0
    %268 = vmatprep.mubr.bf16.mxu0 0
    %269 = vmatmul.mubr.bf16.gmra.mxu0 %v164
    %v270 = vpop.f32.mrf.mxu0
    %v271 = vadd.f32 %v186, %v270
    %v272 = vpop.f32.mrf.mxu0
    %v273 = vpop.f32.mrf.mxu0
    %v274 = vpop.f32.mrf.mxu0
    %275 = vdwg.mxu0
    %v276 = vmax.f32 %v271, 0.0
    %v277 = vpack.c.bf16 %v276, %v276
    %v278 = vld [vmem:[%s5] sm:$0xf]
    %v279 = vld [vmem:[%s5 + $0x4] sm:$0xf]
    %v280 = vld [vmem:[%s5 + $0x8] sm:$0xf]
    %v281 = vld [vmem:[%s5 + $0xc] sm:$0xf]
    %v282 = vld [vmem:[%s5 + $0x10] sm:$0xf]
    %v283 = vld [vmem:[%s5 + $0x14] sm:$0xf]
    %v284 = vld [vmem:[%s5 + $0x18] sm:$0xf]
    %v285 = vld [vmem:[%s5 + $0x1c] sm:$0xf]
    %v286 = vld [vmem:[%s5 + $0x20] sm:$0xf]
    %v287 = vld [vmem:[%s5 + $0x24] sm:$0xf]
    %v288 = vld [vmem:[%s5 + $0x28] sm:$0xf]
    %v289 = vld [vmem:[%s5 + $0x2c] sm:$0xf]
    %v290 = vld [vmem:[%s5 + $0x30] sm:$0xf]
    %v291 = vld [vmem:[%s5 + $0x34] sm:$0xf]
    %v292 = vld [vmem:[%s5 + $0x38] sm:$0xf]
    %v293 = vld [vmem:[%s5 + $0x3c] sm:$0xf]
    %v294 = vld [vmem:[%s6] sm:$0x1]
    %v296 = vlaneseq
    %v297 = vshrl.u32 %v296, 7
    %v298 = vsub.s32 0, %v297
    %v299 = vrot.slane %v294, %v298
    %v317 = vunpack.c.l.b16 %v278
    %v318 = vunpack.c.l.b16 %v279
    %v319 = vunpack.c.l.b16 %v280
    %v320 = vunpack.c.l.b16 %v281
    %v321 = vunpack.c.l.b16 %v282
    %v322 = vunpack.c.l.b16 %v283
    %v323 = vunpack.c.l.b16 %v284
    %v324 = vunpack.c.l.b16 %v285
    %v325 = vunpack.c.l.b16 %v286
    %v326 = vunpack.c.l.b16 %v287
    %v327 = vunpack.c.l.b16 %v288
    %v328 = vunpack.c.l.b16 %v289
    %v329 = vunpack.c.l.b16 %v290
    %v330 = vunpack.c.l.b16 %v291
    %v331 = vunpack.c.l.b16 %v292
    %v332 = vunpack.c.l.b16 %v293
    %v333 = vpack.c.b16 %v318, %v317
    %v334 = vpack.c.b16 %v320, %v319
    %v335 = vpack.c.b16 %v322, %v321
    %v336 = vpack.c.b16 %v324, %v323
    %v337 = vpack.c.b16 %v326, %v325
    %v338 = vpack.c.b16 %v328, %v327
    %v339 = vpack.c.b16 %v330, %v329
    %v340 = vpack.c.b16 %v332, %v331
    %349 = vmatprep.subr.bf16.mxu0 0
    %350 = vmatpush1.bf16.msra.mxu0 %v340
    %351 = vmatprep.subr.bf16.mxu0 0
    %352 = vmatpush1.bf16.msra.mxu0 %v339
    %353 = vmatprep.subr.bf16.mxu0 0
    %354 = vmatpush1.bf16.msra.mxu0 %v338
    %355 = vmatprep.subr.bf16.mxu0 0
    %356 = vmatpush1.bf16.msra.mxu0 %v337
    %357 = vmatprep.subr.bf16.mxu0 0
    %358 = vmatpush1.bf16.msra.mxu0 %v336
    %359 = vmatprep.subr.bf16.mxu0 0
    %360 = vmatpush1.bf16.msra.mxu0 %v335
    %361 = vmatprep.subr.bf16.mxu0 0
    %362 = vmatpush1.bf16.msra.mxu0 %v334
    %363 = vmatprep.subr.bf16.mxu0 0
    %364 = vmatpush1.bf16.msra.mxu0 %v333
    %365 = vmatprep.subr.bf16.mxu0 0
    %366 = vmatpush2.bf16.msra.mxu0 0
    %367 = vmatprep.subr.bf16.mxu0 0
    %368 = vmatpush2.bf16.msra.mxu0 0
    %369 = vmatprep.subr.bf16.mxu0 0
    %370 = vmatpush2.bf16.msra.mxu0 0
    %371 = vmatprep.subr.bf16.mxu0 0
    %372 = vmatpush2.bf16.msra.mxu0 0
    %373 = vmatprep.subr.bf16.mxu0 0
    %374 = vmatpush2.bf16.msra.mxu0 0
    %375 = vmatprep.subr.bf16.mxu0 0
    %376 = vmatpush2.bf16.msra.mxu0 0
    %377 = vmatprep.subr.bf16.mxu0 0
    %378 = vmatpush2.bf16.msra.mxu0 0
    %379 = vmatprep.subr.bf16.mxu0 0
    %380 = vmatpush2.bf16.msra.mxu0 0
    %381 = vmatprep.mubr.bf16.mxu0 0
    %382 = vmatmul.mubr.bf16.gmra.mxu0 %v277
    %v383 = vpop.f32.mrf.mxu0
    %v384 = vadd.f32 %v299, %v383
    %v385 = vpop.f32.mrf.mxu0
    %v386 = vpop.f32.mrf.mxu0
    %v387 = vpop.f32.mrf.mxu0
    %388 = vdwg.mxu0
    %vm389 = vcmask 64512
    %390 = vst.msk [vmem:[#allocation7] sm:$0xff] %vm389, %v384
    // Predicated region
    $region38: #{tpu_custom_call.1} parent=1 // pred_check
      _
    $region39: #{tpu_custom_call.1} parent=1 // pred_check_branch
      %392 = sbr.rel (0) target = $region41
    $region40: #{tpu_custom_call.1} parent=1 // pred_region
      %s394 = ssub.s32 128, 128
      %395 = vsyncadd [#allocation4], %s394
      %s397 = sshll.u32 [#allocation7], 4
      %s398 = int_to_ptr.vmem [resolvable:$true] %s397
      %400 = dma.vmem_to_hbm [thread:$0]  %s398, 128, %s7, [#allocation4]
    $region41: #{tpu_custom_call.1} parent=1 // pred_fallthru
      _
    // Predicated region
    $region42: #{tpu_custom_call.1} parent=1 // pred_check
      _
    $region43: #{tpu_custom_call.1} parent=1 // pred_check_branch
      %402 = sbr.rel (0) target = $region45
    $region44: #{tpu_custom_call.1} parent=1 // pred_region
      %403 = dma.done [#allocation4], 128
    $region45: #{tpu_custom_call.1} parent=1 // pred_fallthru
      _
    %404 = vsyncpa [#allocation3], 1
    %405 = vsyncpa [#allocation6], 1
    %406 = vsyncpa [#allocation4], 1

</llo_original>
